<compile_context>
chip_gen: v5e
topology: v5e:2x2
jax: 0.10.0
libtpu: 0.0.40
codegen_flags: <defaults>
</compile_context>

<pallas_src>
import jax
import jax.numpy as jnp
from jax import lax
from jax.experimental import pallas as pl
from jax.experimental.pallas import tpu as pltpu


_F32_INF_BITS = 0x7F800000  # bit pattern of +inf (sentinel for "already taken")


def _round_up(x, m):
    return ((x + m - 1) // m) * m


def _make_fp_kernel(n_layers, has_p1, s_is_one, n_coord, n_cand, mxu_dtype):
    """Fused 3-NN interpolation + concat + MLP kernel.

    Ref order: [xyz1, xyz2] (if S > 1) + [points1] (if present) + [points2]
               + per-layer weights/biases + out_ref.
    Per-grid-step layouts:
      xyz1    : [1, C, TN]   (points on lanes)
      xyz2    : [1, S, C]    (candidates on sublanes)
      points1 : [1, D1, TN]
      points2 : [1, D2, S]
      weights : [C_out, C_in],  biases: [C_out, 1]
      out     : [1, C_last, TN]
    """

    def mm(a, b):
        return jnp.dot(a.astype(mxu_dtype), b.astype(mxu_dtype),
                       preferred_element_type=jnp.float32)

    def kernel(*refs):
        pos = 0
        if not s_is_one:
            xyz1_ref = refs[pos]
            xyz2_ref = refs[pos + 1]
            pos += 2
        if has_p1:
            p1_ref = refs[pos]
            pos += 1
        p2_ref = refs[pos]
        pos += 1
        wb = refs[pos:-1]
        out_ref = refs[-1]

        tn = out_ref.shape[-1]
        p2 = p2_ref[0]                                  # [D2, S]

        if s_is_one:
            # Reference: points2.repeat(1, N, 1) -> pure broadcast.
            interp = jnp.broadcast_to(p2[:, 0:1], (p2.shape[0], tn))
        else:
            x1 = xyz1_ref[0]                            # [C, TN]
            x2 = xyz2_ref[0]                            # [S, C]
            S = n_cand

            # Pairwise squared distance on the VPU (no MXU, no cancellation):
            #   d[s, n] = sum_c (x2[s, c] - x1[c, n])^2  >= 0
            d = jnp.zeros((S, tn), jnp.float32)
            for c in range(n_coord):
                diff = x2[:, c:c + 1] - x1[c:c + 1, :]  # [S, TN]
                d = d + diff * diff

            # Pack the candidate index into the low mantissa bits so one int32
            # min per iteration yields both the min distance and its argmin.
            n_idx_bits = max(1, (S - 1).bit_length())
            idx_mask = (1 << n_idx_bits) - 1
            iota_s = lax.broadcasted_iota(jnp.int32, (S, tn), 0)
            keys = (pltpu.bitcast(d, jnp.int32) & jnp.int32(~idx_mask)) | iota_s

            # TODO(synk): for very large S (>~2048) switch to an S-tiled
            # streaming top-3 merge to avoid the O(S*TN) weight matrix.
            w = jnp.zeros((S, tn), jnp.float32)
            norm = jnp.zeros((1, tn), jnp.float32)
            for _ in range(3):
                kmin = jnp.min(keys, axis=0, keepdims=True)           # [1, TN]
                idx = kmin & jnp.int32(idx_mask)
                dmin = pltpu.bitcast(kmin & jnp.int32(~idx_mask), jnp.float32)
                recip = 1.0 / (dmin + 1e-8)                           # [1, TN]
                sel = iota_s == idx                                   # [S, TN]
                w = w + jnp.where(sel, recip, 0.0)
                norm = norm + recip
                keys = jnp.where(sel, jnp.int32(_F32_INF_BITS), keys)

            # Gather + weighted sum as one MXU matmul; normalize afterwards
            # ([D2, TN] scaling instead of [S, TN]).
            interp = mm(p2, w) * (1.0 / norm)                         # [D2, TN]

        # MLP: [1x1 conv + folded eval-mode BN + leaky_relu(0.2)] x n_layers.
        # concat([points1, interpolated]) is fused into layer 1 by splitting
        # W1 along its input channels (done on the host).
        if has_p1:
            z = mm(wb[0][...], p1_ref[0]) + mm(wb[1][...], interp) + wb[2][...]
            used = 3
        else:
            z = mm(wb[0][...], interp) + wb[1][...]
            used = 2
        h = jnp.maximum(z, 0.2 * z)                     # leaky_relu(0.2)
        for _ in range(n_layers - 1):
            z = mm(wb[used][...], h) + wb[used + 1][...]
            used += 2
            h = jnp.maximum(z, 0.2 * z)

        out_ref[0] = h

    return kernel


class PointNetFeaturePropagationPallas:
    """Inference-mode forward of PointNetFeaturePropagation (Pallas TPU)."""

    def __init__(self, in_channel, mlp, key, att=None,
                 use_bf16_mxu=True, tile_n=256):
        if att is not None:
            # TODO(synk): Attention_block branch (att != None) not implemented.
            raise NotImplementedError("att branch not implemented")
        assert len(mlp) >= 1
        self.att = None
        self.in_channel = in_channel
        self.mxu_dtype = jnp.bfloat16 if use_bf16_mxu else jnp.float32
        self.tile_n = max(128, _round_up(int(tile_n), 128))
        self.weights = []   # [C_out, C_in] (torch Conv1d layout, squeezed)
        self.biases = []    # [C_out, 1]
        bn_eps = 1e-5
        last_channel = in_channel
        for out_channel in mlp:
            key, kw, kb = jax.random.split(key, 3)
            w = 0.1 * jax.random.normal(kw, (out_channel, last_channel), jnp.float32)
            b = 0.1 * jax.random.normal(kb, (out_channel,), jnp.float32)
            # Fold eval-mode BatchNorm1d (gamma=1, beta=0, mean=0, var=1).
            gamma = jnp.ones((out_channel,), jnp.float32)
            beta = jnp.zeros((out_channel,), jnp.float32)
            running_mean = jnp.zeros((out_channel,), jnp.float32)
            running_var = jnp.ones((out_channel,), jnp.float32)
            scale = gamma / jnp.sqrt(running_var + bn_eps)
            shift = beta - running_mean * scale
            self.weights.append(w * scale[:, None])
            self.biases.append((b * scale + shift).reshape(out_channel, 1))
            last_channel = out_channel

    def __call__(self, xyz1, xyz2, points1, points2):
        """
        xyz1:    [B, C, N]   xyz2:    [B, C, S]
        points1: [B, D1, N] or None   points2: [B, D2, S]
        returns  [B, mlp[-1], N]
        """
        xyz1 = jnp.asarray(xyz1, jnp.float32)
        xyz2 = jnp.asarray(xyz2, jnp.float32)
        points2 = jnp.asarray(points2, jnp.float32)
        B, C, N = xyz1.shape
        S = xyz2.shape[-1]
        D2 = points2.shape[1]
        has_p1 = points1 is not None
        s_is_one = (S == 1)
        n_layers = len(self.weights)
        c_last = self.weights[-1].shape[0]

        # Lane-dense point tile (multiple of 128); pad N up if needed.
        tn = self.tile_n if N > self.tile_n else max(128, _round_up(N, 128))
        n_pad = _round_up(N, tn)

        def pad_n(a):
            return a if n_pad == N else jnp.pad(a, ((0, 0), (0, 0), (0, n_pad - N)))

        grid = (B, n_pad // tn)
        in_specs = []
        operands = []
        if not s_is_one:
            in_specs.append(pl.BlockSpec((1, C, tn), lambda b, j: (b, 0, j)))
            operands.append(pad_n(xyz1))
            # Only xyz2 is transposed (tiny: B*S*C floats) so candidates sit on
            # sublanes; all big tensors keep their native [B, C, N] layout.
            in_specs.append(pl.BlockSpec((1, S, C), lambda b, j: (b, 0, 0)))
            operands.append(jnp.transpose(xyz2, (0, 2, 1)))
        if has_p1:
            p1 = jnp.asarray(points1, jnp.float32)
            d1 = p1.shape[1]
            in_specs.append(pl.BlockSpec((1, d1, tn), lambda b, j: (b, 0, j)))
            operands.append(pad_n(p1))
        in_specs.append(pl.BlockSpec((1, D2, S), lambda b, j: (b, 0, 0)))
        operands.append(points2)

        def add_param(arr):
            rows, cols = arr.shape
            in_specs.append(pl.BlockSpec((rows, cols), lambda b, j: (0, 0)))
            operands.append(arr)

        # First layer: fuse concat([points1, interpolated]) by splitting W1.
        w1, b1 = self.weights[0], self.biases[0]
        if has_p1:
            add_param(w1[:, :d1])
            add_param(w1[:, d1:])
        else:
            add_param(w1)
        add_param(b1)
        for w, b in zip(self.weights[1:], self.biases[1:]):
            add_param(w)
            add_param(b)

        kernel = _make_fp_kernel(n_layers, has_p1, s_is_one, C, S, self.mxu_dtype)
        out = pl.pallas_call(
            kernel,
            out_shape=jax.ShapeDtypeStruct((B, c_last, n_pad), jnp.float32),
            grid=grid,
            in_specs=in_specs,
            out_specs=pl.BlockSpec((1, c_last, tn), lambda b, j: (b, 0, j)),
            compiler_params=pltpu.CompilerParams(
                dimension_semantics=("parallel", "parallel"),
                vmem_limit_bytes=32 * 1024 * 1024,
            ),
        )(*operands)
        return out if n_pad == N else out[:, :, :N]


if __name__ == "__main__":
    key = jax.random.PRNGKey(0)
    B, C, N, S = 2, 3, 64, 16
    D1, D2 = 8, 8
    mlp = [32, 16]

    k1, k2, k3, k4, kparams = jax.random.split(key, 5)
    xyz1 = jax.random.normal(k1, (B, C, N), jnp.float32)
    xyz2 = jax.random.normal(k2, (B, C, S), jnp.float32)
    points1 = jax.random.normal(k3, (B, D1, N), jnp.float32)
    points2 = jax.random.normal(k4, (B, D2, S), jnp.float32)

    module = PointNetFeaturePropagationPallas(in_channel=D1 + D2, mlp=mlp, key=kparams)
    out = module(xyz1, xyz2, points1, points2)
    out = jax.block_until_ready(out)
    assert out.shape == (B, mlp[-1], N), out.shape
    assert out.dtype == jnp.float32
    print("KERNEL_OK")
</pallas_src>

<mosaic_0001>
module attributes {stable_mosaic.version = 11 : i64} {
  func.func @kernel(%arg0: i32, %arg1: i32, %arg2: memref<1x3x128xf32, #tpu.memory_space<vmem>>, %arg3: memref<1x16x3xf32, #tpu.memory_space<vmem>>, %arg4: memref<1x8x128xf32, #tpu.memory_space<vmem>>, %arg5: memref<1x8x16xf32, #tpu.memory_space<vmem>>, %arg6: memref<32x8xf32, #tpu.memory_space<vmem>>, %arg7: memref<32x8xf32, #tpu.memory_space<vmem>>, %arg8: memref<32x1xf32, #tpu.memory_space<vmem>>, %arg9: memref<16x32xf32, #tpu.memory_space<vmem>>, %arg10: memref<16x1xf32, #tpu.memory_space<vmem>>, %arg11: memref<1x16x128xf32, #tpu.memory_space<vmem>>) attributes {dimension_semantics = [#tpu.dimension_semantics<parallel>, #tpu.dimension_semantics<parallel>], iteration_bounds = array<i64: 2, 1>, scalar_prefetch = 0 : i64, scratch_operands = 0 : i64, tpu.core_type = #tpu.core_type<tc>, window_params = [{transform_indices = @transform_0, window_bounds = array<i64: 1, 3, 128>}, {transform_indices = @transform_1, window_bounds = array<i64: 1, 16, 3>}, {transform_indices = @transform_2, window_bounds = array<i64: 1, 8, 128>}, {transform_indices = @transform_3, window_bounds = array<i64: 1, 8, 16>}, {pipeline_mode = #tpu.pipeline_mode<synchronous>, transform_indices = @transform_4, window_bounds = array<i64: 32, 8>}, {pipeline_mode = #tpu.pipeline_mode<synchronous>, transform_indices = @transform_5, window_bounds = array<i64: 32, 8>}, {pipeline_mode = #tpu.pipeline_mode<synchronous>, transform_indices = @transform_6, window_bounds = array<i64: 32, 1>}, {pipeline_mode = #tpu.pipeline_mode<synchronous>, transform_indices = @transform_7, window_bounds = array<i64: 16, 32>}, {pipeline_mode = #tpu.pipeline_mode<synchronous>, transform_indices = @transform_8, window_bounds = array<i64: 16, 1>}, {transform_indices = @transform_9, window_bounds = array<i64: 1, 16, 128>}]} {
    %c0 = arith.constant 0 : index
    %c0_0 = arith.constant 0 : index
    %c0_1 = arith.constant 0 : index
    %0 = vector.load %arg5[%c0, %c0_0, %c0_1] : memref<1x8x16xf32, #tpu.memory_space<vmem>>, vector<1x8x16xf32>
    %1 = vector.shape_cast %0 : vector<1x8x16xf32> to vector<8x16xf32>
    %c0_2 = arith.constant 0 : index
    %c0_3 = arith.constant 0 : index
    %c0_4 = arith.constant 0 : index
    %2 = vector.load %arg2[%c0_2, %c0_3, %c0_4] : memref<1x3x128xf32, #tpu.memory_space<vmem>>, vector<1x3x128xf32>
    %3 = vector.shape_cast %2 : vector<1x3x128xf32> to vector<3x128xf32>
    %c0_5 = arith.constant 0 : index
    %c0_6 = arith.constant 0 : index
    %c0_7 = arith.constant 0 : index
    %4 = vector.load %arg3[%c0_5, %c0_6, %c0_7] : memref<1x16x3xf32, #tpu.memory_space<vmem>>, vector<1x16x3xf32>
    %5 = vector.shape_cast %4 : vector<1x16x3xf32> to vector<16x3xf32>
    %cst = arith.constant 0.000000e+00 : f32
    %6 = vector.broadcast %cst : f32 to vector<16x128xf32>
    %7 = vector.extract_strided_slice %5 {offsets = [0, 0], sizes = [16, 1], strides = [1, 1]} : vector<16x3xf32> to vector<16x1xf32>
    %8 = vector.extract_strided_slice %3 {offsets = [0, 0], sizes = [1, 128], strides = [1, 1]} : vector<3x128xf32> to vector<1x128xf32>
    %9 = vector.broadcast %7 : vector<16x1xf32> to vector<16x128xf32>
    %10 = vector.broadcast %8 : vector<1x128xf32> to vector<16x128xf32>
    %11 = arith.subf %9, %10 : vector<16x128xf32>
    %12 = arith.mulf %11, %11 : vector<16x128xf32>
    %13 = arith.addf %6, %12 : vector<16x128xf32>
    %14 = vector.extract_strided_slice %5 {offsets = [0, 1], sizes = [16, 1], strides = [1, 1]} : vector<16x3xf32> to vector<16x1xf32>
    %15 = vector.extract_strided_slice %3 {offsets = [1, 0], sizes = [1, 128], strides = [1, 1]} : vector<3x128xf32> to vector<1x128xf32>
    %16 = vector.broadcast %14 : vector<16x1xf32> to vector<16x128xf32>
    %17 = vector.broadcast %15 : vector<1x128xf32> to vector<16x128xf32>
    %18 = arith.subf %16, %17 : vector<16x128xf32>
    %19 = arith.mulf %18, %18 : vector<16x128xf32>
    %20 = arith.addf %13, %19 : vector<16x128xf32>
    %21 = vector.extract_strided_slice %5 {offsets = [0, 2], sizes = [16, 1], strides = [1, 1]} : vector<16x3xf32> to vector<16x1xf32>
    %22 = vector.extract_strided_slice %3 {offsets = [2, 0], sizes = [1, 128], strides = [1, 1]} : vector<3x128xf32> to vector<1x128xf32>
    %23 = vector.broadcast %21 : vector<16x1xf32> to vector<16x128xf32>
    %24 = vector.broadcast %22 : vector<1x128xf32> to vector<16x128xf32>
    %25 = arith.subf %23, %24 : vector<16x128xf32>
    %26 = arith.mulf %25, %25 : vector<16x128xf32>
    %27 = arith.addf %20, %26 : vector<16x128xf32>
    %28 = tpu.iota {dimensions = array<i32: 0>} : vector<16x128xi32>
    %29 = tpu.bitcast %27 : vector<16x128xf32> -> vector<16x128xi32>
    %c-16_i32 = arith.constant -16 : i32
    %30 = vector.broadcast %c-16_i32 : i32 to vector<16x128xi32>
    %31 = arith.andi %29, %30 : vector<16x128xi32>
    %32 = arith.ori %31, %28 : vector<16x128xi32>
    %cst_8 = arith.constant 0.000000e+00 : f32
    %33 = vector.broadcast %cst_8 : f32 to vector<16x128xf32>
    %cst_9 = arith.constant 0.000000e+00 : f32
    %34 = vector.broadcast %cst_9 : f32 to vector<1x128xf32>
    %cst_10 = arith.constant dense<2147483647> : vector<128xi32>
    %35 = vector.multi_reduction <minsi>, %32, %cst_10 [0] : vector<16x128xi32> to vector<128xi32>
    %36 = vector.shape_cast %35 : vector<128xi32> to vector<1x128xi32>
    %c15_i32 = arith.constant 15 : i32
    %37 = vector.broadcast %c15_i32 : i32 to vector<1x128xi32>
    %38 = arith.andi %36, %37 : vector<1x128xi32>
    %c-16_i32_11 = arith.constant -16 : i32
    %39 = vector.broadcast %c-16_i32_11 : i32 to vector<1x128xi32>
    %40 = arith.andi %36, %39 : vector<1x128xi32>
    %41 = tpu.bitcast %40 : vector<1x128xi32> -> vector<1x128xf32>
    %cst_12 = arith.constant 9.99999993E-9 : f32
    %42 = vector.broadcast %cst_12 : f32 to vector<1x128xf32>
    %43 = arith.addf %41, %42 : vector<1x128xf32>
    %cst_13 = arith.constant 1.000000e+00 : f32
    %44 = vector.broadcast %cst_13 : f32 to vector<1x128xf32>
    %45 = arith.divf %44, %43 : vector<1x128xf32>
    %46 = vector.broadcast %38 : vector<1x128xi32> to vector<16x128xi32>
    %47 = arith.cmpi eq, %28, %46 : vector<16x128xi32>
    %cst_14 = arith.constant 0.000000e+00 : f32
    %48 = vector.shape_cast %45 : vector<1x128xf32> to vector<1x128xf32>
    %49 = vector.broadcast %48 : vector<1x128xf32> to vector<16x128xf32>
    %50 = vector.broadcast %cst_14 : f32 to vector<16x128xf32>
    %51 = arith.select %47, %49, %50 : vector<16x128xi1>, vector<16x128xf32>
    %52 = arith.addf %33, %51 : vector<16x128xf32>
    %53 = arith.addf %34, %45 : vector<1x128xf32>
    %c2139095040_i32 = arith.constant 2139095040 : i32
    %54 = vector.broadcast %c2139095040_i32 : i32 to vector<16x128xi32>
    %55 = arith.select %47, %54, %32 : vector<16x128xi1>, vector<16x128xi32>
    %cst_15 = arith.constant dense<2147483647> : vector<128xi32>
    %56 = vector.multi_reduction <minsi>, %55, %cst_15 [0] : vector<16x128xi32> to vector<128xi32>
    %57 = vector.shape_cast %56 : vector<128xi32> to vector<1x128xi32>
    %c15_i32_16 = arith.constant 15 : i32
    %58 = vector.broadcast %c15_i32_16 : i32 to vector<1x128xi32>
    %59 = arith.andi %57, %58 : vector<1x128xi32>
    %c-16_i32_17 = arith.constant -16 : i32
    %60 = vector.broadcast %c-16_i32_17 : i32 to vector<1x128xi32>
    %61 = arith.andi %57, %60 : vector<1x128xi32>
    %62 = tpu.bitcast %61 : vector<1x128xi32> -> vector<1x128xf32>
    %cst_18 = arith.constant 9.99999993E-9 : f32
    %63 = vector.broadcast %cst_18 : f32 to vector<1x128xf32>
    %64 = arith.addf %62, %63 : vector<1x128xf32>
    %cst_19 = arith.constant 1.000000e+00 : f32
    %65 = vector.broadcast %cst_19 : f32 to vector<1x128xf32>
    %66 = arith.divf %65, %64 : vector<1x128xf32>
    %67 = vector.broadcast %59 : vector<1x128xi32> to vector<16x128xi32>
    %68 = arith.cmpi eq, %28, %67 : vector<16x128xi32>
    %cst_20 = arith.constant 0.000000e+00 : f32
    %69 = vector.shape_cast %66 : vector<1x128xf32> to vector<1x128xf32>
    %70 = vector.broadcast %69 : vector<1x128xf32> to vector<16x128xf32>
    %71 = vector.broadcast %cst_20 : f32 to vector<16x128xf32>
    %72 = arith.select %68, %70, %71 : vector<16x128xi1>, vector<16x128xf32>
    %73 = arith.addf %52, %72 : vector<16x128xf32>
    %74 = arith.addf %53, %66 : vector<1x128xf32>
    %c2139095040_i32_21 = arith.constant 2139095040 : i32
    %75 = vector.broadcast %c2139095040_i32_21 : i32 to vector<16x128xi32>
    %76 = arith.select %68, %75, %55 : vector<16x128xi1>, vector<16x128xi32>
    %cst_22 = arith.constant dense<2147483647> : vector<128xi32>
    %77 = vector.multi_reduction <minsi>, %76, %cst_22 [0] : vector<16x128xi32> to vector<128xi32>
    %78 = vector.shape_cast %77 : vector<128xi32> to vector<1x128xi32>
    %c15_i32_23 = arith.constant 15 : i32
    %79 = vector.broadcast %c15_i32_23 : i32 to vector<1x128xi32>
    %80 = arith.andi %78, %79 : vector<1x128xi32>
    %c-16_i32_24 = arith.constant -16 : i32
    %81 = vector.broadcast %c-16_i32_24 : i32 to vector<1x128xi32>
    %82 = arith.andi %78, %81 : vector<1x128xi32>
    %83 = tpu.bitcast %82 : vector<1x128xi32> -> vector<1x128xf32>
    %cst_25 = arith.constant 9.99999993E-9 : f32
    %84 = vector.broadcast %cst_25 : f32 to vector<1x128xf32>
    %85 = arith.addf %83, %84 : vector<1x128xf32>
    %cst_26 = arith.constant 1.000000e+00 : f32
    %86 = vector.broadcast %cst_26 : f32 to vector<1x128xf32>
    %87 = arith.divf %86, %85 : vector<1x128xf32>
    %88 = vector.broadcast %80 : vector<1x128xi32> to vector<16x128xi32>
    %89 = arith.cmpi eq, %28, %88 : vector<16x128xi32>
    %cst_27 = arith.constant 0.000000e+00 : f32
    %90 = vector.shape_cast %87 : vector<1x128xf32> to vector<1x128xf32>
    %91 = vector.broadcast %90 : vector<1x128xf32> to vector<16x128xf32>
    %92 = vector.broadcast %cst_27 : f32 to vector<16x128xf32>
    %93 = arith.select %89, %91, %92 : vector<16x128xi1>, vector<16x128xf32>
    %94 = arith.addf %73, %93 : vector<16x128xf32>
    %95 = arith.addf %74, %87 : vector<1x128xf32>
    %96 = arith.truncf %1 : vector<8x16xf32> to vector<8x16xbf16>
    %97 = arith.truncf %94 : vector<16x128xf32> to vector<16x128xbf16>
    %cst_28 = arith.constant dense<0.000000e+00> : vector<8x128xf32>
    %98 = tpu.matmul %96, %97, %cst_28 {dimension_numbers = #tpu.dot_dimension_numbers<[1], [0], [0], [1], [0, 0, 1, 1], [], []>} : vector<8x16xbf16>, vector<16x128xbf16>, vector<8x128xf32> -> vector<8x128xf32>
    %cst_29 = arith.constant 1.000000e+00 : f32
    %99 = vector.broadcast %cst_29 : f32 to vector<1x128xf32>
    %100 = arith.divf %99, %95 : vector<1x128xf32>
    %101 = vector.broadcast %100 : vector<1x128xf32> to vector<8x128xf32>
    %102 = arith.mulf %98, %101 : vector<8x128xf32>
    %c0_30 = arith.constant 0 : index
    %c0_31 = arith.constant 0 : index
    %103 = vector.load %arg6[%c0_30, %c0_31] : memref<32x8xf32, #tpu.memory_space<vmem>>, vector<32x8xf32>
    %c0_32 = arith.constant 0 : index
    %c0_33 = arith.constant 0 : index
    %c0_34 = arith.constant 0 : index
    %104 = vector.load %arg4[%c0_32, %c0_33, %c0_34] : memref<1x8x128xf32, #tpu.memory_space<vmem>>, vector<1x8x128xf32>
    %105 = vector.shape_cast %104 : vector<1x8x128xf32> to vector<8x128xf32>
    %106 = arith.truncf %103 : vector<32x8xf32> to vector<32x8xbf16>
    %107 = arith.truncf %105 : vector<8x128xf32> to vector<8x128xbf16>
    %cst_35 = arith.constant dense<0.000000e+00> : vector<32x128xf32>
    %108 = tpu.matmul %106, %107, %cst_35 {dimension_numbers = #tpu.dot_dimension_numbers<[1], [0], [0], [1], [0, 0, 1, 1], [], []>} : vector<32x8xbf16>, vector<8x128xbf16>, vector<32x128xf32> -> vector<32x128xf32>
    %c0_36 = arith.constant 0 : index
    %c0_37 = arith.constant 0 : index
    %109 = vector.load %arg7[%c0_36, %c0_37] : memref<32x8xf32, #tpu.memory_space<vmem>>, vector<32x8xf32>
    %110 = arith.truncf %109 : vector<32x8xf32> to vector<32x8xbf16>
    %111 = arith.truncf %102 : vector<8x128xf32> to vector<8x128xbf16>
    %cst_38 = arith.constant dense<0.000000e+00> : vector<32x128xf32>
    %112 = tpu.matmul %110, %111, %cst_38 {dimension_numbers = #tpu.dot_dimension_numbers<[1], [0], [0], [1], [0, 0, 1, 1], [], []>} : vector<32x8xbf16>, vector<8x128xbf16>, vector<32x128xf32> -> vector<32x128xf32>
    %113 = arith.addf %108, %112 : vector<32x128xf32>
    %c0_39 = arith.constant 0 : index
    %c0_40 = arith.constant 0 : index
    %114 = vector.load %arg8[%c0_39, %c0_40] : memref<32x1xf32, #tpu.memory_space<vmem>>, vector<32x1xf32>
    %115 = vector.broadcast %114 : vector<32x1xf32> to vector<32x128xf32>
    %116 = arith.addf %113, %115 : vector<32x128xf32>
    %cst_41 = arith.constant 2.000000e-01 : f32
    %117 = vector.broadcast %cst_41 : f32 to vector<32x128xf32>
    %118 = arith.mulf %117, %116 : vector<32x128xf32>
    %119 = arith.maximumf %116, %118 : vector<32x128xf32>
    %c0_42 = arith.constant 0 : index
    %c0_43 = arith.constant 0 : index
    %120 = vector.load %arg9[%c0_42, %c0_43] : memref<16x32xf32, #tpu.memory_space<vmem>>, vector<16x32xf32>
    %121 = arith.truncf %120 : vector<16x32xf32> to vector<16x32xbf16>
    %122 = arith.truncf %119 : vector<32x128xf32> to vector<32x128xbf16>
    %cst_44 = arith.constant dense<0.000000e+00> : vector<16x128xf32>
    %123 = tpu.matmul %121, %122, %cst_44 {dimension_numbers = #tpu.dot_dimension_numbers<[1], [0], [0], [1], [0, 0, 1, 1], [], []>} : vector<16x32xbf16>, vector<32x128xbf16>, vector<16x128xf32> -> vector<16x128xf32>
    %c0_45 = arith.constant 0 : index
    %c0_46 = arith.constant 0 : index
    %124 = vector.load %arg10[%c0_45, %c0_46] : memref<16x1xf32, #tpu.memory_space<vmem>>, vector<16x1xf32>
    %125 = vector.broadcast %124 : vector<16x1xf32> to vector<16x128xf32>
    %126 = arith.addf %123, %125 : vector<16x128xf32>
    %cst_47 = arith.constant 2.000000e-01 : f32
    %127 = vector.broadcast %cst_47 : f32 to vector<16x128xf32>
    %128 = arith.mulf %127, %126 : vector<16x128xf32>
    %129 = arith.maximumf %126, %128 : vector<16x128xf32>
    %c0_48 = arith.constant 0 : index
    %c0_49 = arith.constant 0 : index
    %c0_50 = arith.constant 0 : index
    %130 = vector.load %arg11[%c0_48, %c0_49, %c0_50] : memref<1x16x128xf32, #tpu.memory_space<vmem>>, vector<1x16x128xf32>
    %131 = vector.shape_cast %130 : vector<1x16x128xf32> to vector<16x128xf32>
    %132 = vector.shape_cast %129 : vector<16x128xf32> to vector<1x16x128xf32>
    tpu.vector_store %arg11[%c0_48, %c0_49, %c0_50], %132 {strides = array<i32>} : memref<1x16x128xf32, #tpu.memory_space<vmem>>, vector<1x16x128xf32>,
    return
  }
  func.func @transform_0(%arg0: i32, %arg1: i32) -> (i32, i32, i32) {
    %c0_i32 = arith.constant 0 : i32
    %c0_i32_0 = arith.constant 0 : i32
    return %arg0, %c0_i32, %arg1 : i32, i32, i32
  }
  func.func @transform_1(%arg0: i32, %arg1: i32) -> (i32, i32, i32) {
    %c0_i32 = arith.constant 0 : i32
    %c0_i32_0 = arith.constant 0 : i32
    %c0_i32_1 = arith.constant 0 : i32
    return %arg0, %c0_i32, %c0_i32_0 : i32, i32, i32
  }
  func.func @transform_2(%arg0: i32, %arg1: i32) -> (i32, i32, i32) {
    %c0_i32 = arith.constant 0 : i32
    %c0_i32_0 = arith.constant 0 : i32
    return %arg0, %c0_i32, %arg1 : i32, i32, i32
  }
  func.func @transform_3(%arg0: i32, %arg1: i32) -> (i32, i32, i32) {
    %c0_i32 = arith.constant 0 : i32
    %c0_i32_0 = arith.constant 0 : i32
    %c0_i32_1 = arith.constant 0 : i32
    return %arg0, %c0_i32, %c0_i32_0 : i32, i32, i32
  }
  func.func @transform_4(%arg0: i32, %arg1: i32) -> (i32, i32) {
    %c0_i32 = arith.constant 0 : i32
    %c0_i32_0 = arith.constant 0 : i32
    %c0_i32_1 = arith.constant 0 : i32
    return %c0_i32, %c0_i32_0 : i32, i32
  }
  func.func @transform_5(%arg0: i32, %arg1: i32) -> (i32, i32) {
    %c0_i32 = arith.constant 0 : i32
    %c0_i32_0 = arith.constant 0 : i32
    %c0_i32_1 = arith.constant 0 : i32
    return %c0_i32, %c0_i32_0 : i32, i32
  }
  func.func @transform_6(%arg0: i32, %arg1: i32) -> (i32, i32) {
    %c0_i32 = arith.constant 0 : i32
    %c0_i32_0 = arith.constant 0 : i32
    %c0_i32_1 = arith.constant 0 : i32
    return %c0_i32, %c0_i32_0 : i32, i32
  }
  func.func @transform_7(%arg0: i32, %arg1: i32) -> (i32, i32) {
    %c0_i32 = arith.constant 0 : i32
    %c0_i32_0 = arith.constant 0 : i32
    %c0_i32_1 = arith.constant 0 : i32
    return %c0_i32, %c0_i32_0 : i32, i32
  }
  func.func @transform_8(%arg0: i32, %arg1: i32) -> (i32, i32) {
    %c0_i32 = arith.constant 0 : i32
    %c0_i32_0 = arith.constant 0 : i32
    %c0_i32_1 = arith.constant 0 : i32
    return %c0_i32, %c0_i32_0 : i32, i32
  }
  func.func @transform_9(%arg0: i32, %arg1: i32) -> (i32, i32, i32) {
    %c0_i32 = arith.constant 0 : i32
    %c0_i32_0 = arith.constant 0 : i32
    return %arg0, %c0_i32, %arg1 : i32, i32, i32
  }
}

</mosaic_0001>

<llo_original>
// kernel: tpu_custom_call.1
$region0: #{tpu_custom_call.1}
  #allocation0 [shape = 'u32[]', space=smem, size = 0x4, offset = 0x4, fixed_abs, tag = 'smem constant byte address 0x4 - core index']
  #allocation1 [shape = 'u32[72,128]{1,0:T(1,128)}', space=vmem, size = 0x9000, scoped, tag = 'internal scratch']
  %s0 = inlined_call_operand.vmem [shape: f32[2,3,128], index: 0, kind: input, shape index: {}]
  %s1 = inlined_call_operand.vmem [shape: f32[2,16,3], index: 1, kind: input, shape index: {}]
  %s2 = inlined_call_operand.vmem [shape: f32[2,8,128], index: 2, kind: input, shape index: {}]
  %s3 = inlined_call_operand.vmem [shape: f32[2,8,16], index: 3, kind: input, shape index: {}]
  %s4 = inlined_call_operand.vmem [shape: f32[32,8], index: 4, kind: input, shape index: {}]
  %s5 = inlined_call_operand.vmem [shape: f32[32,8], index: 5, kind: input, shape index: {}]
  %s6 = inlined_call_operand.vmem [shape: f32[32,1], index: 6, kind: input, shape index: {}]
  %s7 = inlined_call_operand.vmem [shape: f32[16,32], index: 7, kind: input, shape index: {}]
  %s8 = inlined_call_operand.vmem [shape: f32[16,1], index: 8, kind: input, shape index: {}]
  %s9 = inlined_call_operand.hbm [shape: f32[2,16,128], index: 9, kind: output, shape index: {}]
  %s10 = sld [smem:[#allocation0]]
  $region69: #{tpu_custom_call.1} parent=0
    _
  %s12 = ssub.s32 1, %s10
  %s13 = scalar_select 0, %s12, %s10
  $region1: #{tpu_custom_call.1} parent=0
    #allocation2 [shape = 'u8[16384]{0}', space=vmem, size = 0x4000, scoped, tag = 'output window, operand 0']
    #allocation3 [shape = 's32[2]{0}', space=sflag, size = 0x8, scoped, tag = 'scoped memory for tpu_custom_call.1']
    %14 = vsyncpa [#allocation3], 0
    %s15 = scalar_lea.sflag [#allocation3], 1
    %16 = vsyncpa %s15, 0
    loop: start=0, step=1, limit=4
    $region2: #{tpu_custom_call.1} parent=1 // loop_pre_header
      _
    $region3: #{tpu_custom_call.1} parent=1 // loop_header
      %s18 = sphi 0, %s22
      %p19 = scmp.ge.s32.totalorder %s18, 4
      %s25 = sphi 0, %s37
      %s26 = sphi 0, %s33
      %s27 = sphi 0, %s25
      %s28 = sphi 0, %s26
      %s29 = sphi 0, %s27
      %s30 = sphi 0, %s28
      %s42 = sphi 0, %s44
      %s45 = sphi 0, %s42
      %s46 = sphi 0, %s45
      %s62 = sphi 0, %s46
      %s68 = sphi 0, %s70
      %s71 = sphi 0, %s68
      %s72 = sphi 0, %s71
      %s88 = sphi 0, %s72
      %s96 = sphi 0, %s98
      %s99 = sphi 0, %s96
      %s100 = sphi 0, %s99
      %s116 = sphi 0, %s100
      %s122 = sphi 0, %s124
      %s125 = sphi 0, %s122
      %s126 = sphi 0, %s125
      %s142 = sphi 0, %s126
      %s146 = sphi 0, %s146
      %s148 = sphi 0, %s146
      %s149 = sphi 0, %s148
      %s163 = sphi 0, %s149
      %s167 = sphi 0, %s167
      %s169 = sphi 0, %s167
      %s170 = sphi 0, %s169
      %s184 = sphi 0, %s170
      %s188 = sphi 0, %s188
      %s190 = sphi 0, %s188
      %s191 = sphi 0, %s190
      %s205 = sphi 0, %s191
      %s209 = sphi 0, %s209
      %s211 = sphi 0, %s209
      %s212 = sphi 0, %s211
      %s226 = sphi 0, %s212
      %s230 = sphi 0, %s230
      %s232 = sphi 0, %s230
      %s233 = sphi 0, %s232
      %s247 = sphi 0, %s233
      %s255 = sphi 0, %s257
      %s258 = sphi 0, %s255
      %s259 = sphi 0, %s258
      %s275 = sphi 0, %s259
    $region4: #{tpu_custom_call.1} parent=1 // loop_header_branch
      %21 = sbr.rel (%p19) target = $region8
    $region5: #{tpu_custom_call.1} parent=1 // loop_body
      %s23 = ssub.s32 %s18, 1
      %s24 = ssub.s32 %s18, 2
      %s31 = sadd.s32 1, %s26
      %p32 = scmp.ge.s32.totalorder %s31, 1
      %s33 = scalar_select %p32, 0, %s31
      %s34 = sadd.s32 1, %s25
      %s35 = scalar_select %p32, %s34, %s25
      %p36 = scmp.ge.s32.totalorder %s35, 2
      %s37 = scalar_select %p36, 0, %s35
      %s38 = ssub.s32 %s25, %s37
      %s39 = ssub.s32 %s26, %s33
      %s40 = sor.u32 %s38, %s39
      %p41 = scmp.eq.s32.totalorder %s40, 0
      %s43 = sadd.s32 %s42, 1
      %s44 = scalar_select %p41, %s42, %s43
      %p47 = pneg %p41
      %p48 = scmp.eq.s32.totalorder %s18, 1
      %p49 = por %p47, %p48
      %p50 = scmp.ne.s32.totalorder %s42, %s45
      %p51 = scmp.eq.s32.totalorder %s18, 0
      %p52 = por %p50, %p51
      %p53 = scmp.ne.s32.totalorder %s42, %s45
      %p54 = scmp.eq.s32.totalorder %s23, 1
      %p55 = por %p53, %p54
      %p56 = scmp.ne.s32.totalorder %s45, %s46
      %p57 = scmp.eq.s32.totalorder %s23, 0
      %p58 = por %p56, %p57
      %p59 = scmp.ne.s32.totalorder %s45, %s46
      %p60 = scmp.eq.s32.totalorder %s24, 1
      %p61 = por %p59, %p60
      %p63 = scmp.ne.s32.totalorder %s46, %s62
      %p64 = scmp.eq.s32.totalorder %s24, 0
      %p65 = por %p63, %p64
      %s66 = ssub.s32 %s25, %s37
      %p67 = scmp.eq.s32.totalorder %s66, 0
      %s69 = sadd.s32 %s68, 1
      %s70 = scalar_select %p67, %s68, %s69
      %p73 = pneg %p67
      %p74 = scmp.eq.s32.totalorder %s18, 1
      %p75 = por %p73, %p74
      %p76 = scmp.ne.s32.totalorder %s68, %s71
      %p77 = scmp.eq.s32.totalorder %s18, 0
      %p78 = por %p76, %p77
      %p79 = scmp.ne.s32.totalorder %s68, %s71
      %p80 = scmp.eq.s32.totalorder %s23, 1
      %p81 = por %p79, %p80
      %p82 = scmp.ne.s32.totalorder %s71, %s72
      %p83 = scmp.eq.s32.totalorder %s23, 0
      %p84 = por %p82, %p83
      %p85 = scmp.ne.s32.totalorder %s71, %s72
      %p86 = scmp.eq.s32.totalorder %s24, 1
      %p87 = por %p85, %p86
      %p89 = scmp.ne.s32.totalorder %s72, %s88
      %p90 = scmp.eq.s32.totalorder %s24, 0
      %p91 = por %p89, %p90
      %s92 = ssub.s32 %s25, %s37
      %s93 = ssub.s32 %s26, %s33
      %s94 = sor.u32 %s92, %s93
      %p95 = scmp.eq.s32.totalorder %s94, 0
      %s97 = sadd.s32 %s96, 1
      %s98 = scalar_select %p95, %s96, %s97
      %p101 = pneg %p95
      %p102 = scmp.eq.s32.totalorder %s18, 1
      %p103 = por %p101, %p102
      %p104 = scmp.ne.s32.totalorder %s96, %s99
      %p105 = scmp.eq.s32.totalorder %s18, 0
      %p106 = por %p104, %p105
      %p107 = scmp.ne.s32.totalorder %s96, %s99
      %p108 = scmp.eq.s32.totalorder %s23, 1
      %p109 = por %p107, %p108
      %p110 = scmp.ne.s32.totalorder %s99, %s100
      %p111 = scmp.eq.s32.totalorder %s23, 0
      %p112 = por %p110, %p111
      %p113 = scmp.ne.s32.totalorder %s99, %s100
      %p114 = scmp.eq.s32.totalorder %s24, 1
      %p115 = por %p113, %p114
      %p117 = scmp.ne.s32.totalorder %s100, %s116
      %p118 = scmp.eq.s32.totalorder %s24, 0
      %p119 = por %p117, %p118
      %s120 = ssub.s32 %s25, %s37
      %p121 = scmp.eq.s32.totalorder %s120, 0
      %s123 = sadd.s32 %s122, 1
      %s124 = scalar_select %p121, %s122, %s123
      %p127 = pneg %p121
      %p128 = scmp.eq.s32.totalorder %s18, 1
      %p129 = por %p127, %p128
      %p130 = scmp.ne.s32.totalorder %s122, %s125
      %p131 = scmp.eq.s32.totalorder %s18, 0
      %p132 = por %p130, %p131
      %p133 = scmp.ne.s32.totalorder %s122, %s125
      %p134 = scmp.eq.s32.totalorder %s23, 1
      %p135 = por %p133, %p134
      %p136 = scmp.ne.s32.totalorder %s125, %s126
      %p137 = scmp.eq.s32.totalorder %s23, 0
      %p138 = por %p136, %p137
      %p139 = scmp.ne.s32.totalorder %s125, %s126
      %p140 = scmp.eq.s32.totalorder %s24, 1
      %p141 = por %p139, %p140
      %p143 = scmp.ne.s32.totalorder %s126, %s142
      %p144 = scmp.eq.s32.totalorder %s24, 0
      %p145 = por %p143, %p144
      %s147 = sadd.s32 %s146, 1
      %p150 = scmp.eq.s32.totalorder %s18, 1
      %p151 = scmp.ne.s32.totalorder %s146, %s148
      %p152 = scmp.eq.s32.totalorder %s18, 0
      %p153 = por %p151, %p152
      %p154 = scmp.ne.s32.totalorder %s146, %s148
      %p155 = scmp.eq.s32.totalorder %s23, 1
      %p156 = por %p154, %p155
      %p157 = scmp.ne.s32.totalorder %s148, %s149
      %p158 = scmp.eq.s32.totalorder %s23, 0
      %p159 = por %p157, %p158
      %p160 = scmp.ne.s32.totalorder %s148, %s149
      %p161 = scmp.eq.s32.totalorder %s24, 1
      %p162 = por %p160, %p161
      %p164 = scmp.ne.s32.totalorder %s149, %s163
      %p165 = scmp.eq.s32.totalorder %s24, 0
      %p166 = por %p164, %p165
      %s168 = sadd.s32 %s167, 1
      %p171 = scmp.eq.s32.totalorder %s18, 1
      %p172 = scmp.ne.s32.totalorder %s167, %s169
      %p173 = scmp.eq.s32.totalorder %s18, 0
      %p174 = por %p172, %p173
      %p175 = scmp.ne.s32.totalorder %s167, %s169
      %p176 = scmp.eq.s32.totalorder %s23, 1
      %p177 = por %p175, %p176
      %p178 = scmp.ne.s32.totalorder %s169, %s170
      %p179 = scmp.eq.s32.totalorder %s23, 0
      %p180 = por %p178, %p179
      %p181 = scmp.ne.s32.totalorder %s169, %s170
      %p182 = scmp.eq.s32.totalorder %s24, 1
      %p183 = por %p181, %p182
      %p185 = scmp.ne.s32.totalorder %s170, %s184
      %p186 = scmp.eq.s32.totalorder %s24, 0
      %p187 = por %p185, %p186
      %s189 = sadd.s32 %s188, 1
      %p192 = scmp.eq.s32.totalorder %s18, 1
      %p193 = scmp.ne.s32.totalorder %s188, %s190
      %p194 = scmp.eq.s32.totalorder %s18, 0
      %p195 = por %p193, %p194
      %p196 = scmp.ne.s32.totalorder %s188, %s190
      %p197 = scmp.eq.s32.totalorder %s23, 1
      %p198 = por %p196, %p197
      %p199 = scmp.ne.s32.totalorder %s190, %s191
      %p200 = scmp.eq.s32.totalorder %s23, 0
      %p201 = por %p199, %p200
      %p202 = scmp.ne.s32.totalorder %s190, %s191
      %p203 = scmp.eq.s32.totalorder %s24, 1
      %p204 = por %p202, %p203
      %p206 = scmp.ne.s32.totalorder %s191, %s205
      %p207 = scmp.eq.s32.totalorder %s24, 0
      %p208 = por %p206, %p207
      %s210 = sadd.s32 %s209, 1
      %p213 = scmp.eq.s32.totalorder %s18, 1
      %p214 = scmp.ne.s32.totalorder %s209, %s211
      %p215 = scmp.eq.s32.totalorder %s18, 0
      %p216 = por %p214, %p215
      %p217 = scmp.ne.s32.totalorder %s209, %s211
      %p218 = scmp.eq.s32.totalorder %s23, 1
      %p219 = por %p217, %p218
      %p220 = scmp.ne.s32.totalorder %s211, %s212
      %p221 = scmp.eq.s32.totalorder %s23, 0
      %p222 = por %p220, %p221
      %p223 = scmp.ne.s32.totalorder %s211, %s212
      %p224 = scmp.eq.s32.totalorder %s24, 1
      %p225 = por %p223, %p224
      %p227 = scmp.ne.s32.totalorder %s212, %s226
      %p228 = scmp.eq.s32.totalorder %s24, 0
      %p229 = por %p227, %p228
      %s231 = sadd.s32 %s230, 1
      %p234 = scmp.eq.s32.totalorder %s18, 1
      %p235 = scmp.ne.s32.totalorder %s230, %s232
      %p236 = scmp.eq.s32.totalorder %s18, 0
      %p237 = por %p235, %p236
      %p238 = scmp.ne.s32.totalorder %s230, %s232
      %p239 = scmp.eq.s32.totalorder %s23, 1
      %p240 = por %p238, %p239
      %p241 = scmp.ne.s32.totalorder %s232, %s233
      %p242 = scmp.eq.s32.totalorder %s23, 0
      %p243 = por %p241, %p242
      %p244 = scmp.ne.s32.totalorder %s232, %s233
      %p245 = scmp.eq.s32.totalorder %s24, 1
      %p246 = por %p244, %p245
      %p248 = scmp.ne.s32.totalorder %s233, %s247
      %p249 = scmp.eq.s32.totalorder %s24, 0
      %p250 = por %p248, %p249
      %s251 = ssub.s32 %s25, %s37
      %s252 = ssub.s32 %s26, %s33
      %s253 = sor.u32 %s251, %s252
      %p254 = scmp.eq.s32.totalorder %s253, 0
      %s256 = sadd.s32 %s255, 1
      %s257 = scalar_select %p254, %s255, %s256
      %p260 = pneg %p254
      %p261 = scmp.eq.s32.totalorder %s18, 1
      %p262 = por %p260, %p261
      %p263 = scmp.ne.s32.totalorder %s255, %s258
      %p264 = scmp.eq.s32.totalorder %s18, 0
      %p265 = por %p263, %p264
      %p266 = scmp.ne.s32.totalorder %s255, %s258
      %p267 = scmp.eq.s32.totalorder %s23, 1
      %p268 = por %p266, %p267
      %p269 = scmp.ne.s32.totalorder %s258, %s259
      %p270 = scmp.eq.s32.totalorder %s23, 0
      %p271 = por %p269, %p270
      %p272 = scmp.ne.s32.totalorder %s258, %s259
      %p273 = scmp.eq.s32.totalorder %s24, 1
      %p274 = por %p272, %p273
      %p276 = scmp.ne.s32.totalorder %s259, %s275
      %p277 = scmp.eq.s32.totalorder %s24, 0
      %p278 = por %p276, %p277
      %p279 = scmp.le.s32.totalorder 1, %s18
      %p280 = scmp.lt.s32.totalorder %s18, 3
      %p281 = pnand %p279, %p280
      %p282 = pneg %p281
      // Predicated region
      $region9: #{tpu_custom_call.1} parent=5 // pred_check
        _
      $region10: #{tpu_custom_call.1} parent=5 // pred_check_branch
        %284 = sbr.rel (%p281) target = $region12
      $region11: #{tpu_custom_call.1} parent=5 // pred_region
        %s285 = ssub.s32 %s18, 1
        // Predicated region
        $region13: #{tpu_custom_call.1} parent=11 // pred_check
          %p286 = pneg %p159
        $region14: #{tpu_custom_call.1} parent=11 // pred_check_branch
          %288 = sbr.rel (%p286) target = $region16
        $region15: #{tpu_custom_call.1} parent=11 // pred_region
          _
        $region16: #{tpu_custom_call.1} parent=11 // pred_fallthru
          _
        // Predicated region
        $region17: #{tpu_custom_call.1} parent=11 // pred_check
          %p289 = pneg %p180
        $region18: #{tpu_custom_call.1} parent=11 // pred_check_branch
          %291 = sbr.rel (%p289) target = $region20
        $region19: #{tpu_custom_call.1} parent=11 // pred_region
          _
        $region20: #{tpu_custom_call.1} parent=11 // pred_fallthru
          _
        // Predicated region
        $region21: #{tpu_custom_call.1} parent=11 // pred_check
          %p292 = pneg %p201
        $region22: #{tpu_custom_call.1} parent=11 // pred_check_branch
          %294 = sbr.rel (%p292) target = $region24
        $region23: #{tpu_custom_call.1} parent=11 // pred_region
          _
        $region24: #{tpu_custom_call.1} parent=11 // pred_fallthru
          _
        // Predicated region
        $region25: #{tpu_custom_call.1} parent=11 // pred_check
          %p295 = pneg %p222
        $region26: #{tpu_custom_call.1} parent=11 // pred_check_branch
          %297 = sbr.rel (%p295) target = $region28
        $region27: #{tpu_custom_call.1} parent=11 // pred_region
          _
        $region28: #{tpu_custom_call.1} parent=11 // pred_fallthru
          _
        // Predicated region
        $region29: #{tpu_custom_call.1} parent=11 // pred_check
          %p298 = pneg %p243
        $region30: #{tpu_custom_call.1} parent=11 // pred_check_branch
          %300 = sbr.rel (%p298) target = $region32
        $region31: #{tpu_custom_call.1} parent=11 // pred_region
          _
        $region32: #{tpu_custom_call.1} parent=11 // pred_fallthru
          _
      $region12: #{tpu_custom_call.1} parent=5 // pred_fallthru
        _
      %p301 = scmp.lt.s32.totalorder %s18, 2
      // Predicated region
      $region33: #{tpu_custom_call.1} parent=5 // pred_check
        %p302 = pneg %p301
      $region34: #{tpu_custom_call.1} parent=5 // pred_check_branch
        %304 = sbr.rel (%p302) target = $region36
      $region35: #{tpu_custom_call.1} parent=5 // pred_region
        // Predicated region
        $region37: #{tpu_custom_call.1} parent=35 // pred_check
          %p305 = pneg %p52
        $region38: #{tpu_custom_call.1} parent=35 // pred_check_branch
          %307 = sbr.rel (%p305) target = $region40
        $region39: #{tpu_custom_call.1} parent=35 // pred_region
          %p308 = scmp.lt.s32.totalorder %s25, 1
          %s309 = scalar_select %p308, %s25, 1
          %p310 = scmp.lt.s32.totalorder %s26, 0
          %s311 = scalar_select %p310, %s26, 0
          %s312 = sadd.s32 %s311, %s309
          %s313 = smul.addr %s312, 4
          %s314 = scalar_lea.vmem %s0, %s313
        $region40: #{tpu_custom_call.1} parent=35 // pred_fallthru
          _
        // Predicated region
        $region41: #{tpu_custom_call.1} parent=35 // pred_check
          %p315 = pneg %p78
        $region42: #{tpu_custom_call.1} parent=35 // pred_check_branch
          %317 = sbr.rel (%p315) target = $region44
        $region43: #{tpu_custom_call.1} parent=35 // pred_region
          %p318 = scmp.lt.s32.totalorder %s25, 1
          %s319 = scalar_select %p318, %s25, 1
          %s320 = smul.addr %s319, 2
          %s321 = smul.addr %s320, 8
          %s322 = scalar_lea.vmem %s1, %s321
        $region44: #{tpu_custom_call.1} parent=35 // pred_fallthru
          _
        // Predicated region
        $region45: #{tpu_custom_call.1} parent=35 // pred_check
          %p323 = pneg %p106
        $region46: #{tpu_custom_call.1} parent=35 // pred_check_branch
          %325 = sbr.rel (%p323) target = $region48
        $region47: #{tpu_custom_call.1} parent=35 // pred_region
          %p326 = scmp.lt.s32.totalorder %s25, 1
          %s327 = scalar_select %p326, %s25, 1
          %p328 = scmp.lt.s32.totalorder %s26, 0
          %s329 = scalar_select %p328, %s26, 0
          %s330 = sadd.s32 %s329, %s327
          %s331 = smul.addr %s330, 8
          %s332 = scalar_lea.vmem %s2, %s331
        $region48: #{tpu_custom_call.1} parent=35 // pred_fallthru
          _
        // Predicated region
        $region49: #{tpu_custom_call.1} parent=35 // pred_check
          %p333 = pneg %p132
        $region50: #{tpu_custom_call.1} parent=35 // pred_check_branch
          %335 = sbr.rel (%p333) target = $region52
        $region51: #{tpu_custom_call.1} parent=35 // pred_region
          %p336 = scmp.lt.s32.totalorder %s25, 1
          %s337 = scalar_select %p336, %s25, 1
          %s338 = smul.addr %s337, 8
          %s339 = scalar_lea.vmem %s3, %s338
        $region52: #{tpu_custom_call.1} parent=35 // pred_fallthru
          _
      $region36: #{tpu_custom_call.1} parent=5 // pred_fallthru
        _
      %p340 = scmp.le.s32.totalorder 1, %s18
      %p341 = scmp.lt.s32.totalorder %s18, 3
      %p342 = pnand %p340, %p341
      %p343 = pneg %p342
      // Predicated region
      $region53: #{tpu_custom_call.1} parent=5 // pred_check
        _
      $region54: #{tpu_custom_call.1} parent=5 // pred_check_branch
        %345 = sbr.rel (%p342) target = $region56
      $region55: #{tpu_custom_call.1} parent=5 // pred_region
        %s346 = ssub.s32 %s18, 1
        %p347 = scmp.lt.s32.totalorder %s27, 1
        %s348 = scalar_select %p347, %s27, 1
        %p349 = scmp.lt.s32.totalorder %s28, 0
        %s350 = scalar_select %p349, %s28, 0
        %s351 = sadd.s32 %s350, %s348
        %s352 = smul.addr %s351, 4
        %s353 = scalar_lea.vmem %s0, %s352
        %p354 = pneg %p58
        %p355 = pneg %p55
        %p356 = scmp.lt.s32.totalorder %s27, 1
        %s357 = scalar_select %p356, %s27, 1
        %s358 = smul.addr %s357, 2
        %s359 = smul.addr %s358, 8
        %s360 = scalar_lea.vmem %s1, %s359
        %p361 = pneg %p84
        %p362 = pneg %p81
        %p363 = scmp.lt.s32.totalorder %s27, 1
        %s364 = scalar_select %p363, %s27, 1
        %p365 = scmp.lt.s32.totalorder %s28, 0
        %s366 = scalar_select %p365, %s28, 0
        %s367 = sadd.s32 %s366, %s364
        %s368 = smul.addr %s367, 8
        %s369 = scalar_lea.vmem %s2, %s368
        %p370 = pneg %p112
        %p371 = pneg %p109
        %p372 = scmp.lt.s32.totalorder %s27, 1
        %s373 = scalar_select %p372, %s27, 1
        %s374 = smul.addr %s373, 8
        %s375 = scalar_lea.vmem %s3, %s374
        %p376 = pneg %p138
        %p377 = pneg %p135
        %p378 = pneg %p159
        %p379 = pneg %p156
        %p380 = pneg %p180
        %p381 = pneg %p177
        %p382 = pneg %p201
        %p383 = pneg %p198
        %p384 = pneg %p222
        %p385 = pneg %p219
        %p386 = pneg %p243
        %p387 = pneg %p240
        %p388 = pneg %p271
        %p389 = pneg %p268
        %s390 = sand.u32 %s258, 1
        %s391 = scalar_lea.sflag [#allocation3], %s390
        %s392 = sand.u32 %s258, 1
        %s393 = smul.addr %s392, 16
        %s394 = scalar_lea.vmem [#allocation2], %s393
        %p395 = scmp.lt.s32.totalorder %s27, 1
        %s396 = scalar_select %p395, %s27, 1
        %p397 = scmp.lt.s32.totalorder %s28, 0
        %s398 = scalar_select %p397, %s28, 0
        %s399 = sadd.s32 %s398, %s396
        %s400 = smul.addr %s399, 4
        %s401 = scalar_lea.vmem %s0, %s400
        %p402 = scmp.lt.s32.totalorder %s27, 1
        %s403 = scalar_select %p402, %s27, 1
        %s404 = smul.addr %s403, 2
        %s405 = smul.addr %s404, 8
        %s406 = scalar_lea.vmem %s1, %s405
        %p407 = scmp.lt.s32.totalorder %s27, 1
        %s408 = scalar_select %p407, %s27, 1
        %p409 = scmp.lt.s32.totalorder %s28, 0
        %s410 = scalar_select %p409, %s28, 0
        %s411 = sadd.s32 %s410, %s408
        %s412 = smul.addr %s411, 8
        %s413 = scalar_lea.vmem %s2, %s412
        %p414 = scmp.lt.s32.totalorder %s27, 1
        %s415 = scalar_select %p414, %s27, 1
        %s416 = smul.addr %s415, 8
        %s417 = scalar_lea.vmem %s3, %s416
        %v419 = vld [vmem:[%s417] sm:$0xff]
        %v420 = vld [vmem:[%s401] sm:$0x7]
        %v421 = vld [vmem:[%s406] sm:$0xff]
        %v422 = vld [vmem:[%s406 + $0x8] sm:$0xff]
        %424 = vset.pattern.permute.xlu0 0
        %425 = vperm.xlu0 %424, %v421
        %v426 = vpop.permute.xlu0 %425
        %429 = vset.pattern.permute.xlu0 0
        %430 = vperm.xlu0 %429, %v422
        %v431 = vpop.permute.xlu0 %430
        %v433 = vperm.slane %v420, 0
        %v434 = vsub.f32 %v426, %v433
        %v435 = vsub.f32 %v431, %v433
        %v436 = vmul.f32 %v434, %v434
        %v437 = vmul.f32 %v435, %v435
        %v438 = vadd.f32 %v436, 0.0
        %v439 = vadd.f32 %v437, 0.0
        %440 = vset.pattern.permute.xlu0 1
        %441 = vperm.xlu0 %440, %v421
        %v442 = vpop.permute.xlu0 %441
        %444 = vset.pattern.permute.xlu0 1
        %445 = vperm.xlu0 %444, %v422
        %v446 = vpop.permute.xlu0 %445
        %v448 = vperm.slane %v420, 1
        %v449 = vsub.f32 %v442, %v448
        %v450 = vsub.f32 %v446, %v448
        %v451 = vmul.f32 %v449, %v449
        %v452 = vmul.f32 %v450, %v450
        %v453 = vadd.f32 %v438, %v451
        %v454 = vadd.f32 %v439, %v452
        %455 = vset.pattern.permute.xlu0 2
        %456 = vperm.xlu0 %455, %v421
        %v457 = vpop.permute.xlu0 %456
        %459 = vset.pattern.permute.xlu0 2
        %460 = vperm.xlu0 %459, %v422
        %v461 = vpop.permute.xlu0 %460
        %v463 = vperm.slane %v420, 2
        %v464 = vsub.f32 %v457, %v463
        %v465 = vsub.f32 %v461, %v463
        %v466 = vmul.f32 %v464, %v464
        %v467 = vmul.f32 %v465, %v465
        %v468 = vadd.f32 %v453, %v466
        %v469 = vadd.f32 %v454, %v467
        %v470 = vlaneseq
        %v471 = vshrl.u32 %v470, 7
        %v472 = vadd.s32 %v471, 8
        %v475 = vand.u32 %v468, 4294967280
        %v476 = vand.u32 %v469, 4294967280
        %v477 = vor.u32 %v475, %v471
        %v478 = vor.u32 %v476, %v472
        %vm479 = vcmp.lt.s32.totalorder %v477, %v478
        %v480 = vsel %vm479, %v477, %v478
        %v481 = vrot.slane %v480, 4
        %vm482 = vcmp.lt.s32.totalorder %v480, %v481
        %v483 = vsel %vm482, %v480, %v481
        %v484 = vrot.slane %v483, 2
        %vm485 = vcmp.lt.s32.totalorder %v483, %v484
        %v486 = vsel %vm485, %v483, %v484
        %v487 = vrot.slane %v486, 1
        %vm488 = vcmp.lt.s32.totalorder %v486, %v487
        %v489 = vsel %vm488, %v486, %v487
        %v490 = vand.u32 %v489, 15
        %v491 = vand.u32 %v489, 4294967280
        %v493 = vadd.f32 %v491, 1e-08
        %v494 = vrcp.pop %v493
        %v495 = vmul.f32 %v493, %v494
        %v496 = vsub.f32 1.0, %v495
        %v497 = vmul.f32 %v494, %v496
        %v498 = vadd.f32 %v494, %v497
        %vm499 = vweird.f32 %v493
        %vm500 = vweird.f32 %v494
        %vm501 = vmor %vm499, %vm500
        %v502 = vsel %vm501, %v494, %v498
        %v503 = vand.u32 2147483647, %v493
        %vm504 = vcmp.eq.f32.partialorder %v503, 8.507059e+37
        %v505 = vand.u32 %v493, 2147483648
        %v506 = vor.u32 1.1754944e-38, %v505
        %v507 = vsel %vm504, %v506, %v502
        %v508 = vmul.f32 1.0, %v507
        %vm509 = vcmp.eq.s32.totalorder %v471, %v490
        %vm510 = vcmp.eq.s32.totalorder %v472, %v490
        %v511 = vsel %vm509, %v508, 0.0
        %v512 = vsel %vm510, %v508, 0.0
        %v513 = vadd.f32 %v511, 0.0
        %v514 = vadd.f32 %v512, 0.0
        %v515 = vadd.f32 %v508, 0.0
        %v516 = vsel %vm509, 2139095040, %v477
        %v517 = vsel %vm510, 2139095040, %v478
        %vm518 = vcmp.lt.s32.totalorder %v516, %v517
        %v519 = vsel %vm518, %v516, %v517
        %v520 = vrot.slane %v519, 4
        %vm521 = vcmp.lt.s32.totalorder %v519, %v520
        %v522 = vsel %vm521, %v519, %v520
        %v523 = vrot.slane %v522, 2
        %vm524 = vcmp.lt.s32.totalorder %v522, %v523
        %v525 = vsel %vm524, %v522, %v523
        %v526 = vrot.slane %v525, 1
        %vm527 = vcmp.lt.s32.totalorder %v525, %v526
        %v528 = vsel %vm527, %v525, %v526
        %v529 = vand.u32 %v528, 15
        %v530 = vand.u32 %v528, 4294967280
        %v532 = vadd.f32 %v530, 1e-08
        %v533 = vrcp.pop %v532
        %v534 = vmul.f32 %v532, %v533
        %v535 = vsub.f32 1.0, %v534
        %v536 = vmul.f32 %v533, %v535
        %v537 = vadd.f32 %v533, %v536
        %vm538 = vweird.f32 %v532
        %vm539 = vweird.f32 %v533
        %vm540 = vmor %vm538, %vm539
        %v541 = vsel %vm540, %v533, %v537
        %v542 = vand.u32 2147483647, %v532
        %vm543 = vcmp.eq.f32.partialorder %v542, 8.507059e+37
        %v544 = vand.u32 %v532, 2147483648
        %v545 = vor.u32 1.1754944e-38, %v544
        %v546 = vsel %vm543, %v545, %v541
        %v547 = vmul.f32 1.0, %v546
        %vm548 = vcmp.eq.s32.totalorder %v471, %v529
        %vm549 = vcmp.eq.s32.totalorder %v472, %v529
        %v550 = vsel %vm548, %v547, 0.0
        %v551 = vsel %vm549, %v547, 0.0
        %v552 = vadd.f32 %v513, %v550
        %v553 = vadd.f32 %v514, %v551
        %v554 = vadd.f32 %v515, %v547
        %v555 = vsel %vm548, 2139095040, %v516
        %v556 = vsel %vm549, 2139095040, %v517
        %vm557 = vcmp.lt.s32.totalorder %v555, %v556
        %v558 = vsel %vm557, %v555, %v556
        %v559 = vrot.slane %v558, 4
        %vm560 = vcmp.lt.s32.totalorder %v558, %v559
        %v561 = vsel %vm560, %v558, %v559
        %v562 = vrot.slane %v561, 2
        %vm563 = vcmp.lt.s32.totalorder %v561, %v562
        %v564 = vsel %vm563, %v561, %v562
        %v565 = vrot.slane %v564, 1
        %vm566 = vcmp.lt.s32.totalorder %v564, %v565
        %v567 = vsel %vm566, %v564, %v565
        %v568 = vand.u32 %v567, 15
        %v569 = vand.u32 %v567, 4294967280
        %v571 = vadd.f32 %v569, 1e-08
        %v572 = vrcp.pop %v571
        %v573 = vmul.f32 %v571, %v572
        %v574 = vsub.f32 1.0, %v573
        %v575 = vmul.f32 %v572, %v574
        %v576 = vadd.f32 %v572, %v575
        %vm577 = vweird.f32 %v571
        %vm578 = vweird.f32 %v572
        %vm579 = vmor %vm577, %vm578
        %v580 = vsel %vm579, %v572, %v576
        %v581 = vand.u32 2147483647, %v571
        %vm582 = vcmp.eq.f32.partialorder %v581, 8.507059e+37
        %v583 = vand.u32 %v571, 2147483648
        %v584 = vor.u32 1.1754944e-38, %v583
        %v585 = vsel %vm582, %v584, %v580
        %v586 = vmul.f32 1.0, %v585
        %vm587 = vcmp.eq.s32.totalorder %v471, %v568
        %vm588 = vcmp.eq.s32.totalorder %v472, %v568
        %v589 = vsel %vm587, %v586, 0.0
        %v590 = vsel %vm588, %v586, 0.0
        %v591 = vadd.f32 %v552, %v589
        %v592 = vadd.f32 %v553, %v590
        %v593 = vadd.f32 %v554, %v586
        %v594 = vpack.c.bf16 %v419, %v419
        %v595 = vpack.c.bf16 %v592, %v591
        %vm596 = vcmask 130048
        %v598 = vsel %vm596, %v594, 0
        %600 = vmatpush.bf16.msra.mxu0 0
        %601 = vmatpush.bf16.msra.mxu0 0
        %602 = vmatpush.bf16.msra.mxu0 0
        %603 = vmatpush.bf16.msra.mxu0 0
        %604 = vmatpush.bf16.msra.mxu0 0
        %605 = vmatpush.bf16.msra.mxu0 0
        %606 = vmatpush.bf16.msra.mxu0 0
        %607 = vmatpush.bf16.msra.mxu0 %v595
        %608 = vmatmul.bf16.gmra.mxu0 %v598
        %v609 = vpop.f32.mrf.mxu0
        %v610 = vadd.f32 0.0, %v609
        %v611 = vpop.f32.mrf.mxu0
        %612 = vdwg.mxu0
        %v613 = vrcp.pop %v593
        %v614 = vmul.f32 %v593, %v613
        %v615 = vsub.f32 1.0, %v614
        %v616 = vmul.f32 %v613, %v615
        %v617 = vadd.f32 %v613, %v616
        %vm618 = vweird.f32 %v593
        %vm619 = vweird.f32 %v613
        %vm620 = vmor %vm618, %vm619
        %v621 = vsel %vm620, %v613, %v617
        %v622 = vand.u32 2147483647, %v593
        %vm623 = vcmp.eq.f32.partialorder %v622, 8.507059e+37
        %v624 = vand.u32 %v593, 2147483648
        %v625 = vor.u32 1.1754944e-38, %v624
        %v626 = vsel %vm623, %v625, %v621
        %v627 = vmul.f32 1.0, %v626
        %v628 = vmul.f32 %v610, %v627
        %v629 = vld [vmem:[%s4] sm:$0xff]
        %v630 = vld [vmem:[%s4 + $0x8] sm:$0xff]
        %v631 = vld [vmem:[%s4 + $0x10] sm:$0xff]
        %v632 = vld [vmem:[%s4 + $0x18] sm:$0xff]
        %v633 = vld [vmem:[%s413] sm:$0xff]
        %v634 = vpack.c.bf16 %v630, %v629
        %v635 = vpack.c.bf16 %v632, %v631
        %v636 = vpack.c.bf16 %v633, %v633
        %v637 = vld [vmem:[%s5] sm:$0xff]
        %v638 = vld [vmem:[%s5 + $0x8] sm:$0xff]
        %v639 = vld [vmem:[%s5 + $0x10] sm:$0xff]
        %v640 = vld [vmem:[%s5 + $0x18] sm:$0xff]
        %v641 = vpack.c.bf16 %v638, %v637
        %v642 = vpack.c.bf16 %v640, %v639
        %v643 = vpack.c.bf16 %v628, %v628
        %vm644 = vcmask 64512
        %v646 = vsel %vm644, %v641, 0
        %v649 = vsel %vm644, %v642, 0
        %vm651 = vcmask 1043456
        %v653 = vsel %vm651, %v643, 0
        %655 = vmatpush.bf16.msra.mxu0 0
        %656 = vmatpush.bf16.msra.mxu0 0
        %657 = vmatpush.bf16.msra.mxu0 0
        %658 = vmatpush.bf16.msra.mxu0 0
        %659 = vmatpush.bf16.msra.mxu0 0
        %660 = vmatpush.bf16.msra.mxu0 0
        %661 = vmatpush.bf16.msra.mxu0 0
        %662 = vmatpush.bf16.msra.mxu0 %v653
        %663 = vmatmul.bf16.gmra.mxu0 %v646
        %v664 = vpop.f32.mrf.mxu0
        %v665 = vadd.f32 0.0, %v664
        %v666 = vpop.f32.mrf.mxu0
        %v667 = vadd.f32 0.0, %v666
        %668 = vmatmul.bf16.gmra.mxu0 %v649
        %v669 = vpop.f32.mrf.mxu0
        %v670 = vadd.f32 0.0, %v669
        %v671 = vpop.f32.mrf.mxu0
        %v672 = vadd.f32 0.0, %v671
        %673 = vdwg.mxu0
        %v675 = vsel %vm644, %v634, 0
        %v678 = vsel %vm644, %v635, 0
        %v681 = vsel %vm651, %v636, 0
        %683 = vmatpush.bf16.msra.mxu0 0
        %684 = vmatpush.bf16.msra.mxu0 0
        %685 = vmatpush.bf16.msra.mxu0 0
        %686 = vmatpush.bf16.msra.mxu0 0
        %687 = vmatpush.bf16.msra.mxu0 0
        %688 = vmatpush.bf16.msra.mxu0 0
        %689 = vmatpush.bf16.msra.mxu0 0
        %690 = vmatpush.bf16.msra.mxu0 %v681
        %691 = vmatmul.bf16.gmra.mxu0 %v675
        %v692 = vpop.f32.mrf.mxu0
        %v693 = vadd.f32 %v665, %v692
        %v694 = vpop.f32.mrf.mxu0
        %v695 = vadd.f32 %v667, %v694
        %696 = vmatmul.bf16.gmra.mxu0 %v678
        %v697 = vpop.f32.mrf.mxu0
        %v698 = vadd.f32 %v670, %v697
        %v699 = vpop.f32.mrf.mxu0
        %v700 = vadd.f32 %v672, %v699
        %701 = vdwg.mxu0
        %v702 = vld [vmem:[%s6] sm:$0xff]
        %v703 = vld [vmem:[%s6 + $0x8] sm:$0xff]
        %v704 = vld [vmem:[%s6 + $0x10] sm:$0xff]
        %v705 = vld [vmem:[%s6 + $0x18] sm:$0xff]
        %707 = vset.pattern.permute.xlu0 0
        %708 = vperm.xlu0 %707, %v702
        %v709 = vpop.permute.xlu0 %708
        %712 = vset.pattern.permute.xlu0 0
        %713 = vperm.xlu0 %712, %v703
        %v714 = vpop.permute.xlu0 %713
        %717 = vset.pattern.permute.xlu0 0
        %718 = vperm.xlu0 %717, %v704
        %v719 = vpop.permute.xlu0 %718
        %722 = vset.pattern.permute.xlu0 0
        %723 = vperm.xlu0 %722, %v705
        %v724 = vpop.permute.xlu0 %723
        %v726 = vadd.f32 %v693, %v709
        %v727 = vadd.f32 %v695, %v714
        %v728 = vadd.f32 %v698, %v719
        %v729 = vadd.f32 %v700, %v724
        %v730 = vmul.f32 %v726, 0.2
        %v731 = vmul.f32 %v727, 0.2
        %v732 = vmul.f32 %v728, 0.2
        %v733 = vmul.f32 %v729, 0.2
        %v734 = vmax.f32 %v726, %v730
        %v735 = vmax.f32 %v727, %v731
        %v736 = vmax.f32 %v728, %v732
        %v737 = vmax.f32 %v729, %v733
        %v738 = vld [vmem:[%s7] sm:$0xff]
        %v739 = vld [vmem:[%s7 + $0x8] sm:$0xff]
        %v740 = vpack.c.bf16 %v739, %v738
        %v741 = vpack.c.bf16 %v735, %v734
        %v742 = vpack.c.bf16 %v737, %v736
        %v743 = vld [vmem:[%s8] sm:$0xff]
        %v744 = vld [vmem:[%s8 + $0x8] sm:$0xff]
        %746 = vset.pattern.permute.xlu0 0
        %747 = vperm.xlu0 %746, %v743
        %v748 = vpop.permute.xlu0 %747
        %751 = vset.pattern.permute.xlu0 0
        %752 = vperm.xlu0 %751, %v744
        %v753 = vpop.permute.xlu0 %752
        %vm755 = vcmask 261120
        %v757 = vsel %vm755, %v740, 0
        %759 = vmatpush.bf16.msra.mxu0 0
        %760 = vmatpush.bf16.msra.mxu0 0
        %761 = vmatpush.bf16.msra.mxu0 0
        %762 = vmatpush.bf16.msra.mxu0 0
        %763 = vmatpush.bf16.msra.mxu0 0
        %764 = vmatpush.bf16.msra.mxu0 0
        %765 = vmatpush.bf16.msra.mxu0 %v742
        %766 = vmatpush.bf16.msra.mxu0 %v741
        %767 = vmatmul.bf16.gmra.mxu0 %v757
        %v768 = vpop.f32.mrf.mxu0
        %v769 = vadd.f32 %v748, %v768
        %v770 = vpop.f32.mrf.mxu0
        %v771 = vadd.f32 %v753, %v770
        %772 = vdwg.mxu0
        %v773 = vmul.f32 %v769, 0.2
        %v774 = vmul.f32 %v771, 0.2
        %v775 = vmax.f32 %v769, %v773
        %v776 = vmax.f32 %v771, %v774
        %777 = vst [vmem:[%s394] sm:$0xff] %v775
        %778 = vst [vmem:[%s394 + $0x8] sm:$0xff] %v776
        %s779 = sand.u32 %s258, 1
        %s780 = scalar_lea.sflag [#allocation3], %s779
        %s781 = sand.u32 %s258, 1
        %s782 = smul.addr %s781, 16
        %s783 = scalar_lea.vmem [#allocation2], %s782
        // Predicated region
        $region57: #{tpu_custom_call.1} parent=55 // pred_check
          %p784 = pneg %p268
        $region58: #{tpu_custom_call.1} parent=55 // pred_check_branch
          %786 = sbr.rel (%p784) target = $region60
        $region59: #{tpu_custom_call.1} parent=55 // pred_region
          %788 = vsyncadd %s780, 0
          %s789 = smul.addr %s27, 2
          %s790 = sadd.s32 %s28, %s789
          %s791 = smul.addr %s790, 8
          %s792 = scalar_lea.hbm %s9, %s791
          %s793 = sshll.u32 %s783, 4
          %s794 = int_to_ptr.vmem [resolvable:$true] %s793
          %s795 = sshll.u32 %s792, 4
          %s796 = int_to_ptr.hbm [resolvable:$true] %s795
          %801 = dma.vmem_to_hbm [thread:$0]  %s794, 256, %s796, %s780, 128, 128, 8
        $region60: #{tpu_custom_call.1} parent=55 // pred_fallthru
          _
      $region56: #{tpu_custom_call.1} parent=5 // pred_fallthru
        _
      %p802 = scmp.le.s32.totalorder 2, %s18
      // Predicated region
      $region61: #{tpu_custom_call.1} parent=5 // pred_check
        %p803 = pneg %p802
      $region62: #{tpu_custom_call.1} parent=5 // pred_check_branch
        %805 = sbr.rel (%p803) target = $region64
      $region63: #{tpu_custom_call.1} parent=5 // pred_region
        %s806 = ssub.s32 %s18, 2
        // Predicated region
        $region65: #{tpu_custom_call.1} parent=63 // pred_check
          %p807 = pneg %p274
        $region66: #{tpu_custom_call.1} parent=63 // pred_check_branch
          %809 = sbr.rel (%p807) target = $region68
        $region67: #{tpu_custom_call.1} parent=63 // pred_region
          %s810 = sand.u32 %s259, 1
          %s811 = scalar_lea.sflag [#allocation3], %s810
          %s812 = sand.u32 %s259, 1
          %s813 = smul.addr %s812, 16
          %s814 = scalar_lea.vmem [#allocation2], %s813
          %816 = dma.done %s811, 256
        $region68: #{tpu_custom_call.1} parent=63 // pred_fallthru
          _
      $region64: #{tpu_custom_call.1} parent=5 // pred_fallthru
        _
    $region6: #{tpu_custom_call.1} parent=1 // loop_footer
      %s22 = sadd.s32 1, %s18
    $region7: #{tpu_custom_call.1} parent=1 // loop_footer_branch
      %17 = sbr.rel target = $region3
    $region8: #{tpu_custom_call.1} parent=1 // loop_exit
      _
    %817 = vsyncpa [#allocation3], 1
    %s818 = scalar_lea.sflag [#allocation3], 1
    %819 = vsyncpa %s818, 1

</llo_original>
